<compile_context>
chip_gen: v7x
topology: tpu7x:2x2x1
jax: 0.10.0
libtpu: 0.0.40
codegen_flags: <defaults>
</compile_context>

<pallas_src>
import functools

import jax
import jax.numpy as jnp
from jax import lax
from jax.experimental import pallas as pl
from jax.experimental.pallas import tpu as pltpu


def _sigmoid(x):
    # Plain exp-based sigmoid (identical formula used in kernel and reference).
    return 1.0 / (1.0 + jnp.exp(-x))


def _lstm_recurrence(xg_ref, whh_ref, out_ref, hn_ref, cn_ref, h_ref, c_ref,
                     *, seq_len, hidden):
    """Shared LSTM time loop.

    xg_ref : (S, B, 4H) precomputed input projection (biases already folded in)
    whh_ref: (H, 4H)    recurrent weight (transposed)
    out_ref: (S, B, H)  per-timestep hidden states (time-major)
    hn_ref, cn_ref: (B, H) final states
    h_ref, c_ref:   (B, H) VMEM scratch holding the recurrent state
    """
    H = hidden
    h_ref[...] = jnp.zeros_like(h_ref)
    c_ref[...] = jnp.zeros_like(c_ref)

    def step(t, carry):
        gates = xg_ref[t] + jnp.dot(h_ref[...], whh_ref[...],
                                    preferred_element_type=jnp.float32)  # (B, 4H)
        i_g = _sigmoid(gates[:, 0:H])
        f_g = _sigmoid(gates[:, H:2 * H])
        g_g = jnp.tanh(gates[:, 2 * H:3 * H])
        o_g = _sigmoid(gates[:, 3 * H:4 * H])
        c_new = f_g * c_ref[...] + i_g * g_g
        h_new = o_g * jnp.tanh(c_new)
        c_ref[...] = c_new
        h_ref[...] = h_new
        out_ref[t] = h_new
        return carry

    lax.fori_loop(0, seq_len, step, 0)
    hn_ref[...] = h_ref[...]
    cn_ref[...] = c_ref[...]


def _embed_lstm_kernel(ids_ref, emb_ref, wih_ref, whh_ref, b_ref,
                       out_ref, hn_ref, cn_ref,
                       xg_ref, h_ref, c_ref,
                       *, seq_len, batch, hidden, vocab):
    """Layer 0: fused embedding lookup (one-hot matmul) + LSTM layer."""
    S, B, V, H = seq_len, batch, vocab, hidden
    ids = ids_ref[...]                                         # (S*B, 1) int32
    iota = lax.broadcasted_iota(jnp.int32, (S * B, V), 1)      # (S*B, V)
    one_hot = (ids == iota).astype(jnp.float32)                # (S*B, V)
    emb = jnp.dot(one_hot, emb_ref[...],
                  preferred_element_type=jnp.float32)          # (S*B, E)
    xg = jnp.dot(emb, wih_ref[...],
                 preferred_element_type=jnp.float32) + b_ref[...]   # (S*B, 4H)
    xg_ref[...] = xg.reshape(S, B, 4 * H)
    _lstm_recurrence(xg_ref, whh_ref, out_ref, hn_ref, cn_ref, h_ref, c_ref,
                     seq_len=S, hidden=H)


def _lstm_layer_kernel(x_ref, wih_ref, whh_ref, b_ref,
                       out_ref, hn_ref, cn_ref,
                       xg_ref, h_ref, c_ref,
                       *, seq_len, batch, hidden):
    """Layers 1..L-1: plain LSTM layer over a (S, B, H_in) feature sequence."""
    S, B, H = seq_len, batch, hidden
    h_in = x_ref.shape[-1]
    x_all = x_ref[...].reshape(S * B, h_in)
    xg = jnp.dot(x_all, wih_ref[...],
                 preferred_element_type=jnp.float32) + b_ref[...]
    xg_ref[...] = xg.reshape(S, B, 4 * H)
    _lstm_recurrence(xg_ref, whh_ref, out_ref, hn_ref, cn_ref, h_ref, c_ref,
                     seq_len=S, hidden=H)


def _full_spec(shape):
    n = len(shape)
    return pl.BlockSpec(shape, lambda i: (0,) * n)


def _run_layer(kernel, inputs, *, S, B, H):
    out_shapes = (
        jax.ShapeDtypeStruct((S, B, H), jnp.float32),   # time-major hidden states
        jax.ShapeDtypeStruct((B, H), jnp.float32),      # h_n
        jax.ShapeDtypeStruct((B, H), jnp.float32),      # c_n
    )
    return pl.pallas_call(
        kernel,
        out_shape=out_shapes,
        grid=(1,),
        in_specs=[_full_spec(x.shape) for x in inputs],
        out_specs=tuple(_full_spec(s.shape) for s in out_shapes),
        scratch_shapes=[
            pltpu.VMEM((S, B, 4 * H), jnp.float32),   # gate pre-activations
            pltpu.VMEM((B, H), jnp.float32),          # h state
            pltpu.VMEM((B, H), jnp.float32),          # c state
        ],
        compiler_params=pltpu.CompilerParams(
            dimension_semantics=("arbitrary",)),
    )(*inputs)


def simple_encoder_forward(ids, params):
    """Pallas forward pass of SimpleEncoder.

    ids: (B, S) int32 token ids.
    Returns (out, (h_n, c_n)) with out (B, S, H) and h_n/c_n (L, B, H),
    matching torch.nn.LSTM(batch_first=True, bidirectional=False).
    """
    B, S = ids.shape
    emb_table = params["embedding"]                   # (V, E)
    V, _ = emb_table.shape
    layers = params["lstm"]
    H = layers[0]["w_hh"].shape[1]                    # w_hh: (4H, H)

    # Time-major flat id column: row index = t * B + b (matches kernel reshape).
    ids_col = jnp.transpose(ids).reshape(S * B, 1).astype(jnp.int32)

    h_finals, c_finals = [], []
    x_seq = None
    for layer_idx, p in enumerate(layers):
        w_ih_t = jnp.transpose(p["w_ih"])             # (in_dim, 4H)
        w_hh_t = jnp.transpose(p["w_hh"])             # (H, 4H)
        bias = (p["b_ih"] + p["b_hh"]).reshape(1, 4 * H)   # fold both biases
        if layer_idx == 0:
            kernel = functools.partial(_embed_lstm_kernel, seq_len=S, batch=B,
                                       hidden=H, vocab=V)
            inputs = (ids_col, emb_table, w_ih_t, w_hh_t, bias)
        else:
            kernel = functools.partial(_lstm_layer_kernel, seq_len=S, batch=B,
                                       hidden=H)
            inputs = (x_seq, w_ih_t, w_hh_t, bias)
        x_seq, h_n, c_n = _run_layer(kernel, inputs, S=S, B=B, H=H)
        h_finals.append(h_n)
        c_finals.append(c_n)

    out = jnp.transpose(x_seq, (1, 0, 2))             # (B, S, H), batch_first
    h_n = jnp.stack(h_finals, axis=0)                 # (L, B, H)
    c_n = jnp.stack(c_finals, axis=0)                 # (L, B, H)
    return out, (h_n, c_n)


def reference_forward(ids, params):
    """Plain-JAX replica of the PyTorch forward for verification."""
    B, S = ids.shape
    x = params["embedding"][ids]                      # (B, S, E)
    h_finals, c_finals = [], []
    for p in params["lstm"]:
        w_ih, w_hh = p["w_ih"], p["w_hh"]             # (4H, in), (4H, H)
        b = p["b_ih"] + p["b_hh"]
        H = w_hh.shape[1]
        h = jnp.zeros((B, H), jnp.float32)
        c = jnp.zeros((B, H), jnp.float32)
        outs = []
        for t in range(S):
            gates = x[:, t, :] @ w_ih.T + h @ w_hh.T + b
            i_g = _sigmoid(gates[:, 0:H])
            f_g = _sigmoid(gates[:, H:2 * H])
            g_g = jnp.tanh(gates[:, 2 * H:3 * H])
            o_g = _sigmoid(gates[:, 3 * H:4 * H])
            c = f_g * c + i_g * g_g
            h = o_g * jnp.tanh(c)
            outs.append(h)
        x = jnp.stack(outs, axis=1)                   # (B, S, H)
        h_finals.append(h)
        c_finals.append(c)
    return x, (jnp.stack(h_finals, axis=0), jnp.stack(c_finals, axis=0))


if __name__ == "__main__":
    configure = {
        "INPUT_SIZE": 64,      # vocab size
        "EMBEDDING_DIM": 32,
        "HIDDEN_SIZE": 32,
        "NUM_LAYERS": 2,
    }
    B, S = 2, 8
    V, E = configure["INPUT_SIZE"], configure["EMBEDDING_DIM"]
    H, L = configure["HIDDEN_SIZE"], configure["NUM_LAYERS"]

    key = jax.random.PRNGKey(0)
    keys = jax.random.split(key, 2 + 4 * L)
    k_emb, k_ids = keys[0], keys[1]
    k_layers = keys[2:]

    lstm_layers = []
    for l in range(L):
        in_dim = E if l == 0 else H
        kw = k_layers[4 * l: 4 * l + 4]
        lstm_layers.append({
            "w_ih": jax.random.normal(kw[0], (4 * H, in_dim), jnp.float32) * 0.1,
            "w_hh": jax.random.normal(kw[1], (4 * H, H), jnp.float32) * 0.1,
            "b_ih": jax.random.normal(kw[2], (4 * H,), jnp.float32) * 0.1,
            "b_hh": jax.random.normal(kw[3], (4 * H,), jnp.float32) * 0.1,
        })

    params = {
        "embedding": jax.random.normal(k_emb, (V, E), jnp.float32),
        "lstm": lstm_layers,
        # TODO(synk): `self.fc = Linear(HIDDEN_SIZE, INPUT_SIZE)` is defined in
        # the module but never used in forward(); intentionally not implemented.
    }

    ids = jax.random.randint(k_ids, (B, S), 0, V, dtype=jnp.int32)

    out_k, (hn_k, cn_k) = simple_encoder_forward(ids, params)
    out_k = jax.block_until_ready(out_k)
    hn_k = jax.block_until_ready(hn_k)
    cn_k = jax.block_until_ready(cn_k)

    out_r, (hn_r, cn_r) = reference_forward(ids, params)

    assert out_k.shape == (B, S, H)
    assert hn_k.shape == (L, B, H) and cn_k.shape == (L, B, H)
    assert jnp.allclose(out_k, out_r, atol=1e-3, rtol=1e-3)
    assert jnp.allclose(hn_k, hn_r, atol=1e-3, rtol=1e-3)
    assert jnp.allclose(cn_k, cn_r, atol=1e-3, rtol=1e-3)

    print("KERNEL_OK")
</pallas_src>

<mosaic_0001>
module attributes {stable_mosaic.version = 11 : i64} {
  func.func @_embed_lstm_kernel(%arg0: i32, %arg1: memref<16x1xi32, #tpu.memory_space<vmem>>, %arg2: memref<64x32xf32, #tpu.memory_space<vmem>>, %arg3: memref<32x128xf32, #tpu.memory_space<vmem>>, %arg4: memref<32x128xf32, #tpu.memory_space<vmem>>, %arg5: memref<1x128xf32, #tpu.memory_space<vmem>>, %arg6: memref<8x2x32xf32, #tpu.memory_space<vmem>>, %arg7: memref<2x32xf32, #tpu.memory_space<vmem>>, %arg8: memref<2x32xf32, #tpu.memory_space<vmem>>, %arg9: memref<8x2x128xf32, #tpu.memory_space<vmem>>, %arg10: memref<2x32xf32, #tpu.memory_space<vmem>>, %arg11: memref<2x32xf32, #tpu.memory_space<vmem>>) attributes {dimension_semantics = [#tpu.dimension_semantics<arbitrary>], iteration_bounds = array<i64: 1>, scalar_prefetch = 0 : i64, scratch_operands = 3 : i64, tpu.core_type = #tpu.core_type<tc>, window_params = [{pipeline_mode = #tpu.pipeline_mode<synchronous>, transform_indices = @transform_0, window_bounds = array<i64: 16, 1>}, {pipeline_mode = #tpu.pipeline_mode<synchronous>, transform_indices = @transform_1, window_bounds = array<i64: 64, 32>}, {pipeline_mode = #tpu.pipeline_mode<synchronous>, transform_indices = @transform_2, window_bounds = array<i64: 32, 128>}, {pipeline_mode = #tpu.pipeline_mode<synchronous>, transform_indices = @transform_3, window_bounds = array<i64: 32, 128>}, {pipeline_mode = #tpu.pipeline_mode<synchronous>, transform_indices = @transform_4, window_bounds = array<i64: 1, 128>}, {pipeline_mode = #tpu.pipeline_mode<synchronous>, transform_indices = @transform_5, window_bounds = array<i64: 8, 2, 32>}, {pipeline_mode = #tpu.pipeline_mode<synchronous>, transform_indices = @transform_6, window_bounds = array<i64: 2, 32>}, {pipeline_mode = #tpu.pipeline_mode<synchronous>, transform_indices = @transform_7, window_bounds = array<i64: 2, 32>}]} {
    %c0 = arith.constant 0 : index
    %c0_0 = arith.constant 0 : index
    %0 = vector.load %arg1[%c0, %c0_0] : memref<16x1xi32, #tpu.memory_space<vmem>>, vector<16x1xi32>
    %1 = tpu.iota {dimensions = array<i32: 1>} : vector<16x64xi32>
    %2 = vector.broadcast %0 : vector<16x1xi32> to vector<16x64xi32>
    %3 = arith.cmpi eq, %2, %1 : vector<16x64xi32>
    %4 = arith.extui %3 : vector<16x64xi1> to vector<16x64xi32>
    %5 = arith.sitofp %4 : vector<16x64xi32> to vector<16x64xf32>
    %c0_1 = arith.constant 0 : index
    %c0_2 = arith.constant 0 : index
    %6 = vector.load %arg2[%c0_1, %c0_2] : memref<64x32xf32, #tpu.memory_space<vmem>>, vector<64x32xf32>
    %cst = arith.constant dense<0.000000e+00> : vector<16x32xf32>
    %7 = tpu.matmul %5, %6, %cst {dimension_numbers = #tpu.dot_dimension_numbers<[1], [0], [0], [1], [0, 0, 1, 1], [], []>} : vector<16x64xf32>, vector<64x32xf32>, vector<16x32xf32> -> vector<16x32xf32>
    %c0_3 = arith.constant 0 : index
    %c0_4 = arith.constant 0 : index
    %8 = vector.load %arg3[%c0_3, %c0_4] : memref<32x128xf32, #tpu.memory_space<vmem>>, vector<32x128xf32>
    %cst_5 = arith.constant dense<0.000000e+00> : vector<16x128xf32>
    %9 = tpu.matmul %7, %8, %cst_5 {dimension_numbers = #tpu.dot_dimension_numbers<[1], [0], [0], [1], [0, 0, 1, 1], [], []>} : vector<16x32xf32>, vector<32x128xf32>, vector<16x128xf32> -> vector<16x128xf32>
    %c0_6 = arith.constant 0 : index
    %c0_7 = arith.constant 0 : index
    %10 = vector.load %arg5[%c0_6, %c0_7] : memref<1x128xf32, #tpu.memory_space<vmem>>, vector<1x128xf32>
    %11 = vector.broadcast %10 : vector<1x128xf32> to vector<16x128xf32>
    %12 = arith.addf %9, %11 : vector<16x128xf32>
    %13 = vector.shape_cast %12 : vector<16x128xf32> to vector<8x2x128xf32>
    %c0_8 = arith.constant 0 : index
    %c0_9 = arith.constant 0 : index
    %c0_10 = arith.constant 0 : index
    %14 = vector.load %arg9[%c0_8, %c0_9, %c0_10] : memref<8x2x128xf32, #tpu.memory_space<vmem>>, vector<8x2x128xf32>
    tpu.vector_store %arg9[%c0_8, %c0_9, %c0_10], %13 {strides = array<i32>} : memref<8x2x128xf32, #tpu.memory_space<vmem>>, vector<8x2x128xf32>,
    %cst_11 = arith.constant 0.000000e+00 : f32
    %15 = vector.broadcast %cst_11 : f32 to vector<2x32xf32>
    %c0_12 = arith.constant 0 : index
    %c0_13 = arith.constant 0 : index
    %16 = vector.load %arg10[%c0_12, %c0_13] : memref<2x32xf32, #tpu.memory_space<vmem>>, vector<2x32xf32>
    tpu.vector_store %arg10[%c0_12, %c0_13], %15 {strides = array<i32>} : memref<2x32xf32, #tpu.memory_space<vmem>>, vector<2x32xf32>,
    %cst_14 = arith.constant 0.000000e+00 : f32
    %17 = vector.broadcast %cst_14 : f32 to vector<2x32xf32>
    %c0_15 = arith.constant 0 : index
    %c0_16 = arith.constant 0 : index
    %18 = vector.load %arg11[%c0_15, %c0_16] : memref<2x32xf32, #tpu.memory_space<vmem>>, vector<2x32xf32>
    tpu.vector_store %arg11[%c0_15, %c0_16], %17 {strides = array<i32>} : memref<2x32xf32, #tpu.memory_space<vmem>>, vector<2x32xf32>,
    %c0_i32 = arith.constant 0 : i32
    %c8_i32 = arith.constant 8 : i32
    %19 = arith.addi %c0_i32, %c8_i32 : i32
    %c1_i32 = arith.constant 1 : i32
    scf.for %arg12 = %c0_i32 to %19 step %c1_i32  : i32 {
      %24 = arith.index_cast %arg12 : i32 to index
      %c0_26 = arith.constant 0 : index
      %c0_27 = arith.constant 0 : index
      %25 = vector.load %arg9[%24, %c0_26, %c0_27] : memref<8x2x128xf32, #tpu.memory_space<vmem>>, vector<1x2x128xf32>
      %26 = vector.shape_cast %25 : vector<1x2x128xf32> to vector<2x128xf32>
      %c0_28 = arith.constant 0 : index
      %c0_29 = arith.constant 0 : index
      %27 = vector.load %arg10[%c0_28, %c0_29] : memref<2x32xf32, #tpu.memory_space<vmem>>, vector<2x32xf32>
      %c0_30 = arith.constant 0 : index
      %c0_31 = arith.constant 0 : index
      %28 = vector.load %arg4[%c0_30, %c0_31] : memref<32x128xf32, #tpu.memory_space<vmem>>, vector<32x128xf32>
      %cst_32 = arith.constant dense<0.000000e+00> : vector<2x128xf32>
      %29 = tpu.matmul %27, %28, %cst_32 {dimension_numbers = #tpu.dot_dimension_numbers<[1], [0], [0], [1], [0, 0, 1, 1], [], []>} : vector<2x32xf32>, vector<32x128xf32>, vector<2x128xf32> -> vector<2x128xf32>
      %30 = arith.addf %26, %29 : vector<2x128xf32>
      %31 = vector.extract_strided_slice %30 {offsets = [0, 0], sizes = [2, 32], strides = [1, 1]} : vector<2x128xf32> to vector<2x32xf32>
      %cst_33 = arith.constant 0.000000e+00 : f32
      %32 = vector.broadcast %cst_33 : f32 to vector<2x32xf32>
      %33 = arith.subf %32, %31 : vector<2x32xf32>
      %34 = math.exp %33 : vector<2x32xf32>
      %cst_34 = arith.constant 1.000000e+00 : f32
      %35 = vector.broadcast %cst_34 : f32 to vector<2x32xf32>
      %36 = arith.addf %35, %34 : vector<2x32xf32>
      %cst_35 = arith.constant 1.000000e+00 : f32
      %37 = vector.broadcast %cst_35 : f32 to vector<2x32xf32>
      %38 = arith.divf %37, %36 : vector<2x32xf32>
      %39 = vector.extract_strided_slice %30 {offsets = [0, 32], sizes = [2, 32], strides = [1, 1]} : vector<2x128xf32> to vector<2x32xf32>
      %cst_36 = arith.constant 0.000000e+00 : f32
      %40 = vector.broadcast %cst_36 : f32 to vector<2x32xf32>
      %41 = arith.subf %40, %39 : vector<2x32xf32>
      %42 = math.exp %41 : vector<2x32xf32>
      %cst_37 = arith.constant 1.000000e+00 : f32
      %43 = vector.broadcast %cst_37 : f32 to vector<2x32xf32>
      %44 = arith.addf %43, %42 : vector<2x32xf32>
      %cst_38 = arith.constant 1.000000e+00 : f32
      %45 = vector.broadcast %cst_38 : f32 to vector<2x32xf32>
      %46 = arith.divf %45, %44 : vector<2x32xf32>
      %47 = vector.extract_strided_slice %30 {offsets = [0, 64], sizes = [2, 32], strides = [1, 1]} : vector<2x128xf32> to vector<2x32xf32>
      %48 = math.tanh %47 : vector<2x32xf32>
      %49 = vector.extract_strided_slice %30 {offsets = [0, 96], sizes = [2, 32], strides = [1, 1]} : vector<2x128xf32> to vector<2x32xf32>
      %cst_39 = arith.constant 0.000000e+00 : f32
      %50 = vector.broadcast %cst_39 : f32 to vector<2x32xf32>
      %51 = arith.subf %50, %49 : vector<2x32xf32>
      %52 = math.exp %51 : vector<2x32xf32>
      %cst_40 = arith.constant 1.000000e+00 : f32
      %53 = vector.broadcast %cst_40 : f32 to vector<2x32xf32>
      %54 = arith.addf %53, %52 : vector<2x32xf32>
      %cst_41 = arith.constant 1.000000e+00 : f32
      %55 = vector.broadcast %cst_41 : f32 to vector<2x32xf32>
      %56 = arith.divf %55, %54 : vector<2x32xf32>
      %c0_42 = arith.constant 0 : index
      %c0_43 = arith.constant 0 : index
      %57 = vector.load %arg11[%c0_42, %c0_43] : memref<2x32xf32, #tpu.memory_space<vmem>>, vector<2x32xf32>
      %58 = arith.mulf %46, %57 : vector<2x32xf32>
      %59 = arith.mulf %38, %48 : vector<2x32xf32>
      %60 = arith.addf %58, %59 : vector<2x32xf32>
      %61 = math.tanh %60 : vector<2x32xf32>
      %62 = arith.mulf %56, %61 : vector<2x32xf32>
      %c0_44 = arith.constant 0 : index
      %c0_45 = arith.constant 0 : index
      %63 = vector.load %arg11[%c0_44, %c0_45] : memref<2x32xf32, #tpu.memory_space<vmem>>, vector<2x32xf32>
      tpu.vector_store %arg11[%c0_44, %c0_45], %60 {strides = array<i32>} : memref<2x32xf32, #tpu.memory_space<vmem>>, vector<2x32xf32>,
      %c0_46 = arith.constant 0 : index
      %c0_47 = arith.constant 0 : index
      %64 = vector.load %arg10[%c0_46, %c0_47] : memref<2x32xf32, #tpu.memory_space<vmem>>, vector<2x32xf32>
      tpu.vector_store %arg10[%c0_46, %c0_47], %62 {strides = array<i32>} : memref<2x32xf32, #tpu.memory_space<vmem>>, vector<2x32xf32>,
      %65 = arith.index_cast %arg12 : i32 to index
      %c0_48 = arith.constant 0 : index
      %c0_49 = arith.constant 0 : index
      %66 = vector.load %arg6[%65, %c0_48, %c0_49] : memref<8x2x32xf32, #tpu.memory_space<vmem>>, vector<1x2x32xf32>
      %67 = vector.shape_cast %66 : vector<1x2x32xf32> to vector<2x32xf32>
      %68 = vector.shape_cast %62 : vector<2x32xf32> to vector<1x2x32xf32>
      tpu.vector_store %arg6[%65, %c0_48, %c0_49], %68 {strides = array<i32>} : memref<8x2x32xf32, #tpu.memory_space<vmem>>, vector<1x2x32xf32>,
    }
    %c8_i32_17 = arith.constant 8 : i32
    %c0_18 = arith.constant 0 : index
    %c0_19 = arith.constant 0 : index
    %20 = vector.load %arg10[%c0_18, %c0_19] : memref<2x32xf32, #tpu.memory_space<vmem>>, vector<2x32xf32>
    %c0_20 = arith.constant 0 : index
    %c0_21 = arith.constant 0 : index
    %21 = vector.load %arg7[%c0_20, %c0_21] : memref<2x32xf32, #tpu.memory_space<vmem>>, vector<2x32xf32>
    tpu.vector_store %arg7[%c0_20, %c0_21], %20 {strides = array<i32>} : memref<2x32xf32, #tpu.memory_space<vmem>>, vector<2x32xf32>,
    %c0_22 = arith.constant 0 : index
    %c0_23 = arith.constant 0 : index
    %22 = vector.load %arg11[%c0_22, %c0_23] : memref<2x32xf32, #tpu.memory_space<vmem>>, vector<2x32xf32>
    %c0_24 = arith.constant 0 : index
    %c0_25 = arith.constant 0 : index
    %23 = vector.load %arg8[%c0_24, %c0_25] : memref<2x32xf32, #tpu.memory_space<vmem>>, vector<2x32xf32>
    tpu.vector_store %arg8[%c0_24, %c0_25], %22 {strides = array<i32>} : memref<2x32xf32, #tpu.memory_space<vmem>>, vector<2x32xf32>,
    return
  }
  func.func @transform_0(%arg0: i32) -> (i32, i32) {
    %c0_i32 = arith.constant 0 : i32
    %c0_i32_0 = arith.constant 0 : i32
    %c0_i32_1 = arith.constant 0 : i32
    return %c0_i32, %c0_i32_0 : i32, i32
  }
  func.func @transform_1(%arg0: i32) -> (i32, i32) {
    %c0_i32 = arith.constant 0 : i32
    %c0_i32_0 = arith.constant 0 : i32
    %c0_i32_1 = arith.constant 0 : i32
    return %c0_i32, %c0_i32_0 : i32, i32
  }
  func.func @transform_2(%arg0: i32) -> (i32, i32) {
    %c0_i32 = arith.constant 0 : i32
    %c0_i32_0 = arith.constant 0 : i32
    %c0_i32_1 = arith.constant 0 : i32
    return %c0_i32, %c0_i32_0 : i32, i32
  }
  func.func @transform_3(%arg0: i32) -> (i32, i32) {
    %c0_i32 = arith.constant 0 : i32
    %c0_i32_0 = arith.constant 0 : i32
    %c0_i32_1 = arith.constant 0 : i32
    return %c0_i32, %c0_i32_0 : i32, i32
  }
  func.func @transform_4(%arg0: i32) -> (i32, i32) {
    %c0_i32 = arith.constant 0 : i32
    %c0_i32_0 = arith.constant 0 : i32
    %c0_i32_1 = arith.constant 0 : i32
    return %c0_i32, %c0_i32_0 : i32, i32
  }
  func.func @transform_5(%arg0: i32) -> (i32, i32, i32) {
    %c0_i32 = arith.constant 0 : i32
    %c0_i32_0 = arith.constant 0 : i32
    %c0_i32_1 = arith.constant 0 : i32
    %c0_i32_2 = arith.constant 0 : i32
    return %c0_i32, %c0_i32_0, %c0_i32_1 : i32, i32, i32
  }
  func.func @transform_6(%arg0: i32) -> (i32, i32) {
    %c0_i32 = arith.constant 0 : i32
    %c0_i32_0 = arith.constant 0 : i32
    %c0_i32_1 = arith.constant 0 : i32
    return %c0_i32, %c0_i32_0 : i32, i32
  }
  func.func @transform_7(%arg0: i32) -> (i32, i32) {
    %c0_i32 = arith.constant 0 : i32
    %c0_i32_0 = arith.constant 0 : i32
    %c0_i32_1 = arith.constant 0 : i32
    return %c0_i32, %c0_i32_0 : i32, i32
  }
}

</mosaic_0001>

<llo_original>
// kernel: tpu_custom_call.1
$region0: #{tpu_custom_call.1}
  #allocation0 [shape = 'u32[]', space=smem, size = 0x4, offset = 0x4, fixed_abs, tag = 'smem constant byte address 0x4 - core index']
  #allocation1 [shape = 'u32[144,128]{1,0:T(1,128)}', space=vmem, size = 0x12000, scoped, tag = 'internal scratch']
  #allocation2 [shape = 'f32[8,2,128]{2,1,0:T(2,128)}', space=vmem, size = 0x2000, scoped, tag = 'scratch operand']
  #allocation3 [shape = 'f32[2,32]{1,0:T(2,128)}', space=vmem, size = 0x400, scoped, tag = 'scratch operand']
  #allocation4 [shape = 'f32[2,32]{1,0:T(2,128)}', space=vmem, size = 0x400, scoped, tag = 'scratch operand']
  %s0 = inlined_call_operand.vmem [shape: s32[16,1], index: 0, kind: input, shape index: {}]
  %s1 = inlined_call_operand.vmem [shape: f32[64,32], index: 1, kind: input, shape index: {}]
  %s2 = inlined_call_operand.vmem [shape: f32[32,128], index: 2, kind: input, shape index: {}]
  %s3 = inlined_call_operand.vmem [shape: f32[32,128], index: 3, kind: input, shape index: {}]
  %s4 = inlined_call_operand.vmem [shape: f32[1,128], index: 4, kind: input, shape index: {}]
  %s5 = inlined_call_operand.hbm [shape: f32[8,2,32], index: 5, kind: output, shape index: {0}]
  %s6 = inlined_call_operand.hbm [shape: f32[2,32], index: 6, kind: output, shape index: {1}]
  %s7 = inlined_call_operand.hbm [shape: f32[2,32], index: 7, kind: output, shape index: {2}]
  %8 = xla_tuple %s5, %s6, %s7
  %s9 = sld [smem:[#allocation0]]
  $region53: #{tpu_custom_call.1} parent=0
    _
  %s11 = ssub.s32 1, %s9
  %s12 = scalar_select 0, %s11, %s9
  $region1: #{tpu_custom_call.1} parent=0
    #allocation5 [shape = 'u8[8192]{0}', space=vmem, size = 0x2000, scoped, tag = 'output window, operand 0, single buffered']
    #allocation6 [shape = 's32[1]{0}', space=sflag, size = 0x4, scoped, tag = 'scoped memory for tpu_custom_call.1']
    #allocation7 [shape = 'u8[1024]{0}', space=vmem, size = 0x400, scoped, tag = 'output window, operand 1, single buffered']
    #allocation8 [shape = 's32[1]{0}', space=sflag, size = 0x4, scoped, tag = 'scoped memory for tpu_custom_call.1']
    #allocation9 [shape = 'u8[1024]{0}', space=vmem, size = 0x400, scoped, tag = 'output window, operand 2, single buffered']
    %13 = vsyncpa [#allocation6], 0
    %14 = vsyncpa [#allocation8], 0
    // Predicated region
    $region2: #{tpu_custom_call.1} parent=1 // pred_check
      _
    $region3: #{tpu_custom_call.1} parent=1 // pred_check_branch
      %16 = sbr.rel (0) target = $region5
    $region4: #{tpu_custom_call.1} parent=1 // pred_region
      _
    $region5: #{tpu_custom_call.1} parent=1 // pred_fallthru
      _
    // Predicated region
    $region6: #{tpu_custom_call.1} parent=1 // pred_check
      _
    $region7: #{tpu_custom_call.1} parent=1 // pred_check_branch
      %18 = sbr.rel (0) target = $region9
    $region8: #{tpu_custom_call.1} parent=1 // pred_region
      _
    $region9: #{tpu_custom_call.1} parent=1 // pred_fallthru
      _
    // Predicated region
    $region10: #{tpu_custom_call.1} parent=1 // pred_check
      _
    $region11: #{tpu_custom_call.1} parent=1 // pred_check_branch
      %20 = sbr.rel (0) target = $region13
    $region12: #{tpu_custom_call.1} parent=1 // pred_region
      _
    $region13: #{tpu_custom_call.1} parent=1 // pred_fallthru
      _
    // Predicated region
    $region14: #{tpu_custom_call.1} parent=1 // pred_check
      _
    $region15: #{tpu_custom_call.1} parent=1 // pred_check_branch
      %22 = sbr.rel (0) target = $region17
    $region16: #{tpu_custom_call.1} parent=1 // pred_region
      _
    $region17: #{tpu_custom_call.1} parent=1 // pred_fallthru
      _
    // Predicated region
    $region18: #{tpu_custom_call.1} parent=1 // pred_check
      _
    $region19: #{tpu_custom_call.1} parent=1 // pred_check_branch
      %24 = sbr.rel (0) target = $region21
    $region20: #{tpu_custom_call.1} parent=1 // pred_region
      _
    $region21: #{tpu_custom_call.1} parent=1 // pred_fallthru
      _
    %v25 = vld [vmem:[%s0] sm:$0xff]
    %v26 = vld [vmem:[%s0 + $0x8] sm:$0xff]
    %v27 = vlaneseq
    %v28 = vand.u32 %v27, 127
    %29 = vset.pattern.permute.xlu0 0
    %30 = vperm.xlu0 %29, %v25
    %v31 = vpop.permute.xlu0 %30
    %32 = vset.pattern.permute.xlu0 0
    %33 = vperm.xlu0 %32, %v26
    %v34 = vpop.permute.xlu0 %33
    %vm35 = vcmp.eq.s32.totalorder %v31, %v28
    %vm36 = vcmp.eq.s32.totalorder %v34, %v28
    %v37 = vsel %vm35, 1, 0
    %v38 = vsel %vm36, 1, 0
    %v39 = vcvt.s32.f32 %v37
    %v40 = vcvt.s32.f32 %v38
    %v41 = vld [vmem:[%s1] sm:$0xff]
    %v42 = vld [vmem:[%s1 + $0x8] sm:$0xff]
    %v43 = vld [vmem:[%s1 + $0x10] sm:$0xff]
    %v44 = vld [vmem:[%s1 + $0x18] sm:$0xff]
    %v45 = vld [vmem:[%s1 + $0x20] sm:$0xff]
    %v46 = vld [vmem:[%s1 + $0x28] sm:$0xff]
    %v47 = vld [vmem:[%s1 + $0x30] sm:$0xff]
    %v48 = vld [vmem:[%s1 + $0x38] sm:$0xff]
    %vm49 = vcmask 523264
    %v51 = vsel %vm49, %v39, 0
    %v54 = vsel %vm49, %v40, 0
    %56 = vmatprep.subr.mxu0 0.0
    %57 = vmatpush1.msra.mxu0 %v41
    %58 = vmatprep.subr.mxu0 0.0
    %59 = vmatpush1.msra.mxu0 %v42
    %60 = vmatprep.subr.mxu0 0.0
    %61 = vmatpush1.msra.mxu0 %v43
    %62 = vmatprep.subr.mxu0 0.0
    %63 = vmatpush1.msra.mxu0 %v44
    %64 = vmatprep.subr.mxu0 0.0
    %65 = vmatpush1.msra.mxu0 %v45
    %66 = vmatprep.subr.mxu0 0.0
    %67 = vmatpush1.msra.mxu0 %v46
    %68 = vmatprep.subr.mxu0 0.0
    %69 = vmatpush1.msra.mxu0 %v47
    %70 = vmatprep.subr.mxu0 0.0
    %71 = vmatpush1.msra.mxu0 %v48
    %72 = vmatprep.subr.mxu0 0.0
    %73 = vmatpush1.msra.mxu0 0.0
    %74 = vmatprep.subr.mxu0 0.0
    %75 = vmatpush1.msra.mxu0 0.0
    %76 = vmatprep.subr.mxu0 0.0
    %77 = vmatpush1.msra.mxu0 0.0
    %78 = vmatprep.subr.mxu0 0.0
    %79 = vmatpush1.msra.mxu0 0.0
    %80 = vmatprep.subr.mxu0 0.0
    %81 = vmatpush1.msra.mxu0 0.0
    %82 = vmatprep.subr.mxu0 0.0
    %83 = vmatpush1.msra.mxu0 0.0
    %84 = vmatprep.subr.mxu0 0.0
    %85 = vmatpush1.msra.mxu0 0.0
    %86 = vmatprep.subr.mxu0 0.0
    %87 = vmatpush1.msra.mxu0 0.0
    %88 = vmatprep.subr.mxu0 0.0
    %89 = vmatpush1.msra.mxu0 0.0
    %90 = vmatprep.subr.mxu0 0.0
    %91 = vmatpush1.msra.mxu0 0.0
    %92 = vmatprep.subr.mxu0 0.0
    %93 = vmatpush1.msra.mxu0 0.0
    %94 = vmatprep.subr.mxu0 0.0
    %95 = vmatpush1.msra.mxu0 0.0
    %96 = vmatprep.subr.mxu0 0.0
    %97 = vmatpush1.msra.mxu0 0.0
    %98 = vmatprep.subr.mxu0 0.0
    %99 = vmatpush1.msra.mxu0 0.0
    %100 = vmatprep.subr.mxu0 0.0
    %101 = vmatpush1.msra.mxu0 0.0
    %102 = vmatprep.subr.mxu0 0.0
    %103 = vmatpush1.msra.mxu0 0.0
    %104 = vmatprep.subr.mxu0 0.0
    %105 = vmatpush1.msra.mxu0 0.0
    %106 = vmatprep.subr.mxu0 0.0
    %107 = vmatpush1.msra.mxu0 0.0
    %108 = vmatprep.subr.mxu0 0.0
    %109 = vmatpush1.msra.mxu0 0.0
    %110 = vmatprep.subr.mxu0 0.0
    %111 = vmatpush1.msra.mxu0 0.0
    %112 = vmatprep.subr.mxu0 0.0
    %113 = vmatpush1.msra.mxu0 0.0
    %114 = vmatprep.subr.mxu0 0.0
    %115 = vmatpush1.msra.mxu0 0.0
    %116 = vmatprep.subr.mxu0 0.0
    %117 = vmatpush1.msra.mxu0 0.0
    %118 = vmatprep.subr.mxu0 0.0
    %119 = vmatpush1.msra.mxu0 0.0
    %120 = vmatprep.mubr.f32.mxu0 0.0
    %121 = vmatmul.mubr.f32.gmra.mrb[0].mxu0 %v51
    %v122 = vpop.f32.mrb[0].mxu0
    %v123 = vadd.f32 0.0, %v122
    %v124 = vpop.f32.mrb[0].mxu0
    %125 = vmatprep.mubr.f32.mxu0 0.0
    %126 = vmatmul.mubr.f32.gmra.mrb[0].mxu0 %v54
    %v127 = vpop.f32.mrb[0].mxu0
    %v128 = vadd.f32 0.0, %v127
    %v129 = vpop.f32.mrb[0].mxu0
    %130 = vdwg.mxu0
    %v131 = vld [vmem:[%s2] sm:$0xff]
    %v132 = vld [vmem:[%s2 + $0x8] sm:$0xff]
    %v133 = vld [vmem:[%s2 + $0x10] sm:$0xff]
    %v134 = vld [vmem:[%s2 + $0x18] sm:$0xff]
    %v135 = vld [vmem:[%s4] sm:$0x1]
    %v137 = vlaneseq
    %v138 = vshrl.u32 %v137, 7
    %v139 = vsub.s32 0, %v138
    %v140 = vrot.slane %v135, %v139
    %vm142 = vcmask 261120
    %v144 = vsel %vm142, %v123, 0
    %v147 = vsel %vm142, %v128, 0
    %149 = vmatprep.subr.mxu0 0.0
    %150 = vmatpush1.msra.mxu0 %v131
    %151 = vmatprep.subr.mxu0 0.0
    %152 = vmatpush1.msra.mxu0 %v132
    %153 = vmatprep.subr.mxu0 0.0
    %154 = vmatpush1.msra.mxu0 %v133
    %155 = vmatprep.subr.mxu0 0.0
    %156 = vmatpush1.msra.mxu0 %v134
    %157 = vmatprep.subr.mxu0 0.0
    %158 = vmatpush1.msra.mxu0 0.0
    %159 = vmatprep.subr.mxu0 0.0
    %160 = vmatpush1.msra.mxu0 0.0
    %161 = vmatprep.subr.mxu0 0.0
    %162 = vmatpush1.msra.mxu0 0.0
    %163 = vmatprep.subr.mxu0 0.0
    %164 = vmatpush1.msra.mxu0 0.0
    %165 = vmatprep.subr.mxu0 0.0
    %166 = vmatpush1.msra.mxu0 0.0
    %167 = vmatprep.subr.mxu0 0.0
    %168 = vmatpush1.msra.mxu0 0.0
    %169 = vmatprep.subr.mxu0 0.0
    %170 = vmatpush1.msra.mxu0 0.0
    %171 = vmatprep.subr.mxu0 0.0
    %172 = vmatpush1.msra.mxu0 0.0
    %173 = vmatprep.subr.mxu0 0.0
    %174 = vmatpush1.msra.mxu0 0.0
    %175 = vmatprep.subr.mxu0 0.0
    %176 = vmatpush1.msra.mxu0 0.0
    %177 = vmatprep.subr.mxu0 0.0
    %178 = vmatpush1.msra.mxu0 0.0
    %179 = vmatprep.subr.mxu0 0.0
    %180 = vmatpush1.msra.mxu0 0.0
    %181 = vmatprep.subr.mxu0 0.0
    %182 = vmatpush1.msra.mxu0 0.0
    %183 = vmatprep.subr.mxu0 0.0
    %184 = vmatpush1.msra.mxu0 0.0
    %185 = vmatprep.subr.mxu0 0.0
    %186 = vmatpush1.msra.mxu0 0.0
    %187 = vmatprep.subr.mxu0 0.0
    %188 = vmatpush1.msra.mxu0 0.0
    %189 = vmatprep.subr.mxu0 0.0
    %190 = vmatpush1.msra.mxu0 0.0
    %191 = vmatprep.subr.mxu0 0.0
    %192 = vmatpush1.msra.mxu0 0.0
    %193 = vmatprep.subr.mxu0 0.0
    %194 = vmatpush1.msra.mxu0 0.0
    %195 = vmatprep.subr.mxu0 0.0
    %196 = vmatpush1.msra.mxu0 0.0
    %197 = vmatprep.subr.mxu0 0.0
    %198 = vmatpush1.msra.mxu0 0.0
    %199 = vmatprep.subr.mxu0 0.0
    %200 = vmatpush1.msra.mxu0 0.0
    %201 = vmatprep.subr.mxu0 0.0
    %202 = vmatpush1.msra.mxu0 0.0
    %203 = vmatprep.subr.mxu0 0.0
    %204 = vmatpush1.msra.mxu0 0.0
    %205 = vmatprep.subr.mxu0 0.0
    %206 = vmatpush1.msra.mxu0 0.0
    %207 = vmatprep.subr.mxu0 0.0
    %208 = vmatpush1.msra.mxu0 0.0
    %209 = vmatprep.subr.mxu0 0.0
    %210 = vmatpush1.msra.mxu0 0.0
    %211 = vmatprep.subr.mxu0 0.0
    %212 = vmatpush1.msra.mxu0 0.0
    %213 = vmatprep.mubr.f32.mxu0 0.0
    %214 = vmatmul.mubr.f32.gmra.mrb[0].mxu0 %v144
    %v215 = vpop.f32.mrb[0].mxu0
    %v216 = vadd.f32 %v140, %v215
    %v217 = vpop.f32.mrb[0].mxu0
    %218 = vmatprep.mubr.f32.mxu0 0.0
    %219 = vmatmul.mubr.f32.gmra.mrb[0].mxu0 %v147
    %v220 = vpop.f32.mrb[0].mxu0
    %v221 = vadd.f32 %v140, %v220
    %v222 = vpop.f32.mrb[0].mxu0
    %223 = vdwg.mxu0
    %v226 = vcombine.high %v216, %v216
    %v228 = vunpack.c.l.s4 1983009808
    %v229 = vunpack.c.0.s8 %v228
    %v230 = vlaneseq
    %v231 = vshrl.u32 %v230, 7
    %v232 = vsub.s32 %v229, %v231
    %v233 = vrot.slane %v216, %v232
    %v235 = vunpack.c.l.s4 1983009808
    %v236 = vunpack.c.0.s8 %v235
    %v237 = vlaneseq
    %v238 = vshrl.u32 %v237, 7
    %v239 = vsub.s32 %v236, %v238
    %v240 = vrot.slane %v226, %v239
    %v241 = vcombine.high %v233, %v233
    %v242 = vcombine.high %v240, %v240
    %v243 = vcombine.high %v221, %v221
    %v245 = vunpack.c.l.s4 1983009808
    %v246 = vunpack.c.0.s8 %v245
    %v247 = vlaneseq
    %v248 = vshrl.u32 %v247, 7
    %v249 = vsub.s32 %v246, %v248
    %v250 = vrot.slane %v221, %v249
    %v252 = vunpack.c.l.s4 1983009808
    %v253 = vunpack.c.0.s8 %v252
    %v254 = vlaneseq
    %v255 = vshrl.u32 %v254, 7
    %v256 = vsub.s32 %v253, %v255
    %v257 = vrot.slane %v243, %v256
    %v258 = vcombine.high %v250, %v250
    %v259 = vcombine.high %v257, %v257
    %268 = vst [vmem:[#allocation2] sm:$0x3] %v233
    %269 = vst [vmem:[#allocation2 + $0x2] sm:$0x3] %v241
    %270 = vst [vmem:[#allocation2 + $0x4] sm:$0x3] %v240
    %271 = vst [vmem:[#allocation2 + $0x6] sm:$0x3] %v242
    %272 = vst [vmem:[#allocation2 + $0x8] sm:$0x3] %v250
    %273 = vst [vmem:[#allocation2 + $0xa] sm:$0x3] %v258
    %274 = vst [vmem:[#allocation2 + $0xc] sm:$0x3] %v257
    %275 = vst [vmem:[#allocation2 + $0xe] sm:$0x3] %v259
    %vm276 = vcmask 254976
    %277 = vst.msk [vmem:[#allocation3] sm:$0x3] %vm276, 0.0
    %278 = vst.msk [vmem:[#allocation4] sm:$0x3] %vm276, 0.0
    loop: start=0, step=1, limit=8
    $region22: #{tpu_custom_call.1} parent=1 // loop_pre_header
      _
    $region23: #{tpu_custom_call.1} parent=1 // loop_header
      %s280 = sphi 0, %s284
      %p281 = scmp.ge.s32.totalorder %s280, 8
    $region24: #{tpu_custom_call.1} parent=1 // loop_header_branch
      %283 = sbr.rel (%p281) target = $region28
    $region25: #{tpu_custom_call.1} parent=1 // loop_body
      %s285 = smul.u32 %s280, 2
      %s286 = scalar_lea.vmem [#allocation2], %s285
      %v287 = vld [vmem:[%s286] sm:$0x3]
      %v288 = vld [vmem:[#allocation3] sm:$0x3]
      %v289 = vld [vmem:[%s3] sm:$0xff]
      %v290 = vld [vmem:[%s3 + $0x8] sm:$0xff]
      %v291 = vld [vmem:[%s3 + $0x10] sm:$0xff]
      %v292 = vld [vmem:[%s3 + $0x18] sm:$0xff]
      %v294 = vsel %vm142, %v288, 0
      %296 = vmatprep.subr.mxu0 0.0
      %297 = vmatpush1.msra.mxu0 %v289
      %298 = vmatprep.subr.mxu0 0.0
      %299 = vmatpush1.msra.mxu0 %v290
      %300 = vmatprep.subr.mxu0 0.0
      %301 = vmatpush1.msra.mxu0 %v291
      %302 = vmatprep.subr.mxu0 0.0
      %303 = vmatpush1.msra.mxu0 %v292
      %304 = vmatprep.subr.mxu0 0.0
      %305 = vmatpush1.msra.mxu0 0.0
      %306 = vmatprep.subr.mxu0 0.0
      %307 = vmatpush1.msra.mxu0 0.0
      %308 = vmatprep.subr.mxu0 0.0
      %309 = vmatpush1.msra.mxu0 0.0
      %310 = vmatprep.subr.mxu0 0.0
      %311 = vmatpush1.msra.mxu0 0.0
      %312 = vmatprep.subr.mxu0 0.0
      %313 = vmatpush1.msra.mxu0 0.0
      %314 = vmatprep.subr.mxu0 0.0
      %315 = vmatpush1.msra.mxu0 0.0
      %316 = vmatprep.subr.mxu0 0.0
      %317 = vmatpush1.msra.mxu0 0.0
      %318 = vmatprep.subr.mxu0 0.0
      %319 = vmatpush1.msra.mxu0 0.0
      %320 = vmatprep.subr.mxu0 0.0
      %321 = vmatpush1.msra.mxu0 0.0
      %322 = vmatprep.subr.mxu0 0.0
      %323 = vmatpush1.msra.mxu0 0.0
      %324 = vmatprep.subr.mxu0 0.0
      %325 = vmatpush1.msra.mxu0 0.0
      %326 = vmatprep.subr.mxu0 0.0
      %327 = vmatpush1.msra.mxu0 0.0
      %328 = vmatprep.subr.mxu0 0.0
      %329 = vmatpush1.msra.mxu0 0.0
      %330 = vmatprep.subr.mxu0 0.0
      %331 = vmatpush1.msra.mxu0 0.0
      %332 = vmatprep.subr.mxu0 0.0
      %333 = vmatpush1.msra.mxu0 0.0
      %334 = vmatprep.subr.mxu0 0.0
      %335 = vmatpush1.msra.mxu0 0.0
      %336 = vmatprep.subr.mxu0 0.0
      %337 = vmatpush1.msra.mxu0 0.0
      %338 = vmatprep.subr.mxu0 0.0
      %339 = vmatpush1.msra.mxu0 0.0
      %340 = vmatprep.subr.mxu0 0.0
      %341 = vmatpush1.msra.mxu0 0.0
      %342 = vmatprep.subr.mxu0 0.0
      %343 = vmatpush1.msra.mxu0 0.0
      %344 = vmatprep.subr.mxu0 0.0
      %345 = vmatpush1.msra.mxu0 0.0
      %346 = vmatprep.subr.mxu0 0.0
      %347 = vmatpush1.msra.mxu0 0.0
      %348 = vmatprep.subr.mxu0 0.0
      %349 = vmatpush1.msra.mxu0 0.0
      %350 = vmatprep.subr.mxu0 0.0
      %351 = vmatpush1.msra.mxu0 0.0
      %352 = vmatprep.subr.mxu0 0.0
      %353 = vmatpush1.msra.mxu0 0.0
      %354 = vmatprep.subr.mxu0 0.0
      %355 = vmatpush1.msra.mxu0 0.0
      %356 = vmatprep.subr.mxu0 0.0
      %357 = vmatpush1.msra.mxu0 0.0
      %358 = vmatprep.subr.mxu0 0.0
      %359 = vmatpush1.msra.mxu0 0.0
      %360 = vmatprep.mubr.f32.mxu0 0.0
      %361 = vmatmul.mubr.f32.gmra.mrb[0].mxu0 %v294
      %v362 = vpop.f32.mrb[0].mxu0
      %v363 = vadd.f32 0.0, %v362
      %v364 = vpop.f32.mrb[0].mxu0
      %365 = vdwg.mxu0
      %v366 = vadd.f32 %v287, %v363
      %v367 = vsub.f32 0.0, %v366
      %v368 = vmul.f32 %v367, 1.442695
      %v369 = vpow.pop %v368
      %v370 = vadd.f32 %v369, 1.0
      %v371 = vrcp.pop %v370
      %v372 = vmul.f32 1.0, %v371
      %v373 = vtanh.pop %v366
      %v374 = vld [vmem:[#allocation4] sm:$0x3]
      %376 = vrot.lane.b32.xlu0 %v374, 32
      %v377 = vpop.permute.xlu0 %376
      %v379 = vmul.f32 %v372, %v377
      %381 = vrot.lane.b32.xlu0 %v373, 64
      %v382 = vpop.permute.xlu0 %381
      %v384 = vmul.f32 %v372, %v382
      %386 = vrot.lane.b32.xlu0 %v384, 32
      %v387 = vpop.permute.xlu0 %386
      %v389 = vadd.f32 %v379, %v387
      %v390 = vtanh.pop %v389
      %392 = vrot.lane.b32.xlu0 %v390, 64
      %v393 = vpop.permute.xlu0 %392
      %v395 = vmul.f32 %v372, %v393
      %397 = vrot.lane.b32.xlu0 %v389, 96
      %v398 = vpop.permute.xlu0 %397
      %400 = vst.msk [vmem:[#allocation4] sm:$0x3] %vm276, %v398
      %402 = vrot.lane.b32.xlu0 %v395, 32
      %v403 = vpop.permute.xlu0 %402
      %405 = vst.msk [vmem:[#allocation3] sm:$0x3] %vm276, %v403
      %s406 = scalar_lea.vmem [#allocation5], %s285
      %407 = vst.msk [vmem:[%s406] sm:$0x3] %vm276, %v403
    $region26: #{tpu_custom_call.1} parent=1 // loop_footer
      %s284 = sadd.s32 1, %s280
    $region27: #{tpu_custom_call.1} parent=1 // loop_footer_branch
      %279 = sbr.rel target = $region23
    $region28: #{tpu_custom_call.1} parent=1 // loop_exit
      _
    %v408 = vld [vmem:[#allocation3] sm:$0x3]
    %409 = vst.msk [vmem:[#allocation7] sm:$0x3] %vm276, %v408
    %v410 = vld [vmem:[#allocation4] sm:$0x3]
    %411 = vst.msk [vmem:[#allocation9] sm:$0x3] %vm276, %v410
    // Predicated region
    $region29: #{tpu_custom_call.1} parent=1 // pred_check
      _
    $region30: #{tpu_custom_call.1} parent=1 // pred_check_branch
      %413 = sbr.rel (0) target = $region32
    $region31: #{tpu_custom_call.1} parent=1 // pred_region
      %s415 = ssub.s32 256, 256
      %416 = vsyncadd [#allocation6], %s415
      %s417 = sshll.u32 [#allocation5], 4
      %s418 = int_to_ptr.vmem [resolvable:$true] %s417
      %423 = dma.vmem_to_hbm [thread:$0]  %s418, 256, %s5, [#allocation6], 32, 32, 2
    $region32: #{tpu_custom_call.1} parent=1 // pred_fallthru
      _
    // Predicated region
    $region33: #{tpu_custom_call.1} parent=1 // pred_check
      _
    $region34: #{tpu_custom_call.1} parent=1 // pred_check_branch
      %425 = sbr.rel (0) target = $region36
    $region35: #{tpu_custom_call.1} parent=1 // pred_region
      %s427 = ssub.s32 32, 32
      %428 = vsyncadd [#allocation8], %s427
      %s430 = sshll.u32 [#allocation7], 4
      %s431 = int_to_ptr.vmem [resolvable:$true] %s430
      %433 = dma.vmem_to_hbm [thread:$0]  %s431, 32, %s6, [#allocation8]
    $region36: #{tpu_custom_call.1} parent=1 // pred_fallthru
      _
    // Predicated region
    $region37: #{tpu_custom_call.1} parent=1 // pred_check
      _
    $region38: #{tpu_custom_call.1} parent=1 // pred_check_branch
      %435 = sbr.rel (0) target = $region40
    $region39: #{tpu_custom_call.1} parent=1 // pred_region
      %s437 = ssub.s32 32, 32
      %438 = vsyncadd [#allocation8], %s437
      %s440 = sshll.u32 [#allocation9], 4
      %s441 = int_to_ptr.vmem [resolvable:$true] %s440
      %443 = dma.vmem_to_hbm [thread:$0]  %s441, 32, %s7, [#allocation8]
    $region40: #{tpu_custom_call.1} parent=1 // pred_fallthru
      _
    // Predicated region
    $region41: #{tpu_custom_call.1} parent=1 // pred_check
      _
    $region42: #{tpu_custom_call.1} parent=1 // pred_check_branch
      %445 = sbr.rel (0) target = $region44
    $region43: #{tpu_custom_call.1} parent=1 // pred_region
      %446 = dma.done [#allocation6], 256
    $region44: #{tpu_custom_call.1} parent=1 // pred_fallthru
      _
    // Predicated region
    $region45: #{tpu_custom_call.1} parent=1 // pred_check
      _
    $region46: #{tpu_custom_call.1} parent=1 // pred_check_branch
      %448 = sbr.rel (0) target = $region48
    $region47: #{tpu_custom_call.1} parent=1 // pred_region
      %449 = dma.done [#allocation8], 32
    $region48: #{tpu_custom_call.1} parent=1 // pred_fallthru
      _
    // Predicated region
    $region49: #{tpu_custom_call.1} parent=1 // pred_check
      _
    $region50: #{tpu_custom_call.1} parent=1 // pred_check_branch
      %451 = sbr.rel (0) target = $region52
    $region51: #{tpu_custom_call.1} parent=1 // pred_region
      %452 = dma.done [#allocation8], 32
    $region52: #{tpu_custom_call.1} parent=1 // pred_fallthru
      _
    %453 = vsyncpa [#allocation6], 1
    %454 = vsyncpa [#allocation8], 1

</llo_original>
